<compile_context>
chip_gen: v7x
topology: tpu7x:2x2x1
jax: 0.10.0
libtpu: 0.0.40
codegen_flags: <defaults>
</compile_context>

<pallas_src>
import jax
import jax.numpy as jnp
from jax.experimental import pallas as pl
from jax.experimental.pallas import tpu as pltpu

GAMMA = 2.0          # hard-coded as an explicit square in the kernel
ALPHA = 0.25
LANES = 128
MAX_ROW_TILE = 8192  # 8192 x 128 x 4 B = 4 MiB per f32 input block
VMEM_LIMIT_BYTES = 32 * 1024 * 1024  # > v5e's 16 MiB scoped default; fits v7x physical


def _min_sublane(dtype):
    # Minimum second-to-last block dim for this dtype: 8 (f32), 16 (bf16/f16), 32 (8-bit).
    return max(8, 32 // jnp.dtype(dtype).itemsize)


def _num_shards():
    # 2 TensorCores per chip on v7x; 1 on v5e/v6e.  Fallback: 1.
    try:
        kind = jax.devices()[0].device_kind.lower()
    except Exception:
        return 1
    return 2 if "v7" in kind else 1


def _focal_elems_f32(x, t):
    """Elementwise focal loss term (f32 math), gamma=2 as explicit square."""
    x = x.astype(jnp.float32)
    t = t.astype(jnp.float32)
    # numerically-stable binary_cross_entropy_with_logits (reduction='none')
    bce = jnp.maximum(x, 0.0) - x * t + jnp.log1p(jnp.exp(-jnp.abs(x)))
    pt = jnp.exp(-bce)
    one_minus_pt = 1.0 - pt
    return (ALPHA * one_minus_pt * one_minus_pt) * bce


def _make_kernel(row_tile, main_rows, needs_mask):
    def kernel(x_ref, t_ref, out_ref):
        j = pl.program_id(1)

        @pl.when(j == 0)
        def _():
            out_ref[...] = jnp.zeros_like(out_ref)

        focal = _focal_elems_f32(x_ref[...], t_ref[...])

        if needs_mask:
            # Mask rows past the valid row count (ragged last block / clamped
            # overflow blocks).  main_rows is static, so this branch is only
            # compiled in when padding is actually possible.
            s = pl.program_id(0)
            base_row = (s * pl.num_programs(1) + j) * row_tile
            row_ids = base_row + jax.lax.broadcasted_iota(
                jnp.int32, (row_tile, LANES), 0)
            focal = jnp.where(row_ids < main_rows, focal, 0.0)

        # Fold row_tile rows into the resident (8, 128) output block:
        # pure VPU vreg adds, no per-step cross-lane reduce, no big scratch.
        out_ref[...] += focal.reshape(row_tile // 8, 8, LANES).sum(axis=0)

    return kernel


def binary_focal_loss(logits, targets):
    """Mean binary focal loss == BinaryFocalLoss(gamma=2.0, alpha=0.25, use_logits=True)."""
    assert logits.shape == targets.shape
    total_n = logits.size
    assert total_n > 0

    flat_x = logits.reshape(-1)
    flat_t = targets.reshape(-1)

    # Rows that go through the kernel must be a multiple of the sublane tile;
    # everything past that (< 8*128 elements for f32) is summed in plain JAX.
    row_align = max(_min_sublane(logits.dtype), _min_sublane(targets.dtype))
    main_rows = (total_n // (LANES * row_align)) * row_align
    main_n = main_rows * LANES
    tail_n = total_n - main_n

    total_sum = jnp.float32(0.0)

    if tail_n:
        total_sum = total_sum + jnp.sum(
            _focal_elems_f32(flat_x[main_n:], flat_t[main_n:]))

    if main_rows:
        # Common NCHW case: tail_n == 0, so these reshapes are free views (no copy).
        x_main = flat_x if tail_n == 0 else flat_x[:main_n]
        t_main = flat_t if tail_n == 0 else flat_t[:main_n]
        x2d = x_main.reshape(main_rows, LANES)
        t2d = t_main.reshape(main_rows, LANES)

        row_tile = min(MAX_ROW_TILE, main_rows)        # multiple of row_align
        num_blocks = pl.cdiv(main_rows, row_tile)
        num_shards = min(_num_shards(), num_blocks)
        steps_per_shard = pl.cdiv(num_blocks, num_shards)
        covered_rows = num_shards * steps_per_shard * row_tile
        needs_mask = covered_rows > main_rows
        needs_clamp = num_shards * steps_per_shard > num_blocks

        if needs_clamp:
            def row_block(s, j):
                return (jnp.minimum(s * steps_per_shard + j, num_blocks - 1), 0)
        else:
            def row_block(s, j):
                return (s * steps_per_shard + j, 0)

        out = pl.pallas_call(
            _make_kernel(row_tile, main_rows, needs_mask),
            out_shape=jax.ShapeDtypeStruct((num_shards * 8, LANES), jnp.float32),
            grid_spec=pltpu.PrefetchScalarGridSpec(
                num_scalar_prefetch=0,
                grid=(num_shards, steps_per_shard),
                in_specs=[
                    pl.BlockSpec((row_tile, LANES), row_block),
                    pl.BlockSpec((row_tile, LANES), row_block),
                ],
                out_specs=pl.BlockSpec((8, LANES), lambda s, j: (s, 0)),
            ),
            compiler_params=pltpu.CompilerParams(
                dimension_semantics=("parallel", "arbitrary"),
                vmem_limit_bytes=VMEM_LIMIT_BYTES,
            ),
        )(x2d, t2d)

        # One cross-lane reduce over num_shards x (8, 128) partials, in the wrapper.
        total_sum = total_sum + jnp.sum(out)

    return total_sum / jnp.float32(total_n)


def _reference(logits, targets):
    x = logits.astype(jnp.float32)
    t = targets.astype(jnp.float32)
    bce = jnp.maximum(x, 0.0) - x * t + jnp.log1p(jnp.exp(-jnp.abs(x)))
    pt = jnp.exp(-bce)
    return jnp.mean(ALPHA * (1.0 - pt) ** GAMMA * bce)


if __name__ == "__main__":
    key = jax.random.PRNGKey(0)

    # Primary check: NCHW shape like the PyTorch module would receive.
    k1, k2, k3, k4 = jax.random.split(key, 4)
    B, C, H, W = 2, 4, 16, 16
    logits = jax.random.normal(k1, (B, C, H, W), dtype=jnp.float32) * 2.0
    targets = (jax.random.uniform(k2, (B, C, H, W)) > 0.5).astype(jnp.float32)

    loss = jax.block_until_ready(binary_focal_loss(logits, targets))
    ref = _reference(logits, targets)
    assert jnp.allclose(loss, ref, rtol=1e-4, atol=1e-6), (loss, ref)

    # Secondary check: unaligned element count exercises the plain-JAX tail path.
    shape2 = (3, 5, 7, 11)
    logits2 = jax.random.normal(k3, shape2, dtype=jnp.float32) * 2.0
    targets2 = (jax.random.uniform(k4, shape2) > 0.5).astype(jnp.float32)
    loss2 = jax.block_until_ready(binary_focal_loss(logits2, targets2))
    ref2 = _reference(logits2, targets2)
    assert jnp.allclose(loss2, ref2, rtol=1e-4, atol=1e-6), (loss2, ref2)

    print("KERNEL_OK")
</pallas_src>

<mosaic_0001>
module attributes {stable_mosaic.version = 11 : i64} {
  func.func @kernel(%arg0: i32, %arg1: i32, %arg2: memref<16x128xf32, #tpu.memory_space<vmem>>, %arg3: memref<16x128xf32, #tpu.memory_space<vmem>>, %arg4: memref<8x128xf32, #tpu.memory_space<vmem>>) attributes {dimension_semantics = [#tpu.dimension_semantics<parallel>, #tpu.dimension_semantics<arbitrary>], iteration_bounds = array<i64: 1, 1>, scalar_prefetch = 0 : i64, scratch_operands = 0 : i64, tpu.core_type = #tpu.core_type<tc>, window_params = [{transform_indices = @transform_0, window_bounds = array<i64: 16, 128>}, {transform_indices = @transform_1, window_bounds = array<i64: 16, 128>}, {transform_indices = @transform_2, window_bounds = array<i64: 8, 128>}]} {
    %c0_i32 = arith.constant 0 : i32
    %0 = arith.cmpi eq, %arg1, %c0_i32 : i32
    %1 = arith.extui %0 : i1 to i32
    %c0_i32_0 = arith.constant 0 : i32
    %2 = arith.cmpi ne, %1, %c0_i32_0 : i32
    scf.if %2 {
      %cst_13 = arith.constant 0.000000e+00 : f32
      %29 = vector.broadcast %cst_13 : f32 to vector<8x128xf32>
      %c0_14 = arith.constant 0 : index
      %c0_15 = arith.constant 0 : index
      %30 = vector.load %arg4[%c0_14, %c0_15] : memref<8x128xf32, #tpu.memory_space<vmem>>, vector<8x128xf32>
      tpu.vector_store %arg4[%c0_14, %c0_15], %29 {strides = array<i32>} : memref<8x128xf32, #tpu.memory_space<vmem>>, vector<8x128xf32>,
    } else {
    }
    %c0 = arith.constant 0 : index
    %c0_1 = arith.constant 0 : index
    %3 = vector.load %arg2[%c0, %c0_1] : memref<16x128xf32, #tpu.memory_space<vmem>>, vector<16x128xf32>
    %c0_2 = arith.constant 0 : index
    %c0_3 = arith.constant 0 : index
    %4 = vector.load %arg3[%c0_2, %c0_3] : memref<16x128xf32, #tpu.memory_space<vmem>>, vector<16x128xf32>
    %cst = arith.constant 0.000000e+00 : f32
    %5 = vector.broadcast %cst : f32 to vector<16x128xf32>
    %6 = arith.maximumf %3, %5 : vector<16x128xf32>
    %7 = arith.mulf %3, %4 : vector<16x128xf32>
    %8 = arith.subf %6, %7 : vector<16x128xf32>
    %9 = math.absf %3 : vector<16x128xf32>
    %cst_4 = arith.constant 0.000000e+00 : f32
    %10 = vector.broadcast %cst_4 : f32 to vector<16x128xf32>
    %11 = arith.subf %10, %9 : vector<16x128xf32>
    %12 = math.exp %11 : vector<16x128xf32>
    %13 = math.log1p %12 : vector<16x128xf32>
    %14 = arith.addf %8, %13 : vector<16x128xf32>
    %cst_5 = arith.constant 0.000000e+00 : f32
    %15 = vector.broadcast %cst_5 : f32 to vector<16x128xf32>
    %16 = arith.subf %15, %14 : vector<16x128xf32>
    %17 = math.exp %16 : vector<16x128xf32>
    %cst_6 = arith.constant 1.000000e+00 : f32
    %18 = vector.broadcast %cst_6 : f32 to vector<16x128xf32>
    %19 = arith.subf %18, %17 : vector<16x128xf32>
    %cst_7 = arith.constant 2.500000e-01 : f32
    %20 = vector.broadcast %cst_7 : f32 to vector<16x128xf32>
    %21 = arith.mulf %20, %19 : vector<16x128xf32>
    %22 = arith.mulf %21, %19 : vector<16x128xf32>
    %23 = arith.mulf %22, %14 : vector<16x128xf32>
    %c0_8 = arith.constant 0 : index
    %c0_9 = arith.constant 0 : index
    %24 = vector.load %arg4[%c0_8, %c0_9] : memref<8x128xf32, #tpu.memory_space<vmem>>, vector<8x128xf32>
    %25 = vector.shape_cast %23 : vector<16x128xf32> to vector<2x8x128xf32>
    %cst_10 = arith.constant dense<0.000000e+00> : vector<8x128xf32>
    %26 = vector.multi_reduction <add>, %25, %cst_10 [0] : vector<2x8x128xf32> to vector<8x128xf32>
    %27 = arith.addf %24, %26 : vector<8x128xf32>
    %c0_11 = arith.constant 0 : index
    %c0_12 = arith.constant 0 : index
    %28 = vector.load %arg4[%c0_11, %c0_12] : memref<8x128xf32, #tpu.memory_space<vmem>>, vector<8x128xf32>
    tpu.vector_store %arg4[%c0_11, %c0_12], %27 {strides = array<i32>} : memref<8x128xf32, #tpu.memory_space<vmem>>, vector<8x128xf32>,
    return
  }
  func.func @transform_0(%arg0: i32, %arg1: i32) -> (i32, i32) {
    %c1_i32 = arith.constant 1 : i32
    %0 = arith.muli %arg0, %c1_i32 : i32
    %1 = arith.addi %0, %arg1 : i32
    %c0_i32 = arith.constant 0 : i32
    %c0_i32_0 = arith.constant 0 : i32
    return %1, %c0_i32 : i32, i32
  }
  func.func @transform_1(%arg0: i32, %arg1: i32) -> (i32, i32) {
    %c1_i32 = arith.constant 1 : i32
    %0 = arith.muli %arg0, %c1_i32 : i32
    %1 = arith.addi %0, %arg1 : i32
    %c0_i32 = arith.constant 0 : i32
    %c0_i32_0 = arith.constant 0 : i32
    return %1, %c0_i32 : i32, i32
  }
  func.func @transform_2(%arg0: i32, %arg1: i32) -> (i32, i32) {
    %c0_i32 = arith.constant 0 : i32
    %c0_i32_0 = arith.constant 0 : i32
    return %arg0, %c0_i32 : i32, i32
  }
}

</mosaic_0001>

<llo_original>
// kernel: tpu_custom_call.1
$region0: #{tpu_custom_call.1}
  #allocation0 [shape = 'u32[]', space=smem, size = 0x4, offset = 0x4, fixed_abs, tag = 'smem constant byte address 0x4 - core index']
  #allocation1 [shape = 'u32[144,128]{1,0:T(1,128)}', space=vmem, size = 0x12000, scoped, tag = 'internal scratch']
  %s0 = inlined_call_operand.hbm [shape: f32[16,128], index: 0, kind: input, shape index: {}]
  %s1 = inlined_call_operand.hbm [shape: f32[16,128], index: 1, kind: input, shape index: {}]
  %s2 = inlined_call_operand.hbm [shape: f32[8,128], index: 2, kind: output, shape index: {}]
  %s3 = sld [smem:[#allocation0]]
  $region30: #{tpu_custom_call.1} parent=0
    _
  %s5 = ssub.s32 1, %s3
  %s6 = scalar_select 0, %s5, %s3
  $region1: #{tpu_custom_call.1} parent=0
    #allocation2 [shape = 'u8[8192]{0}', space=vmem, size = 0x2000, scoped, tag = 'input window, operand 0, single buffered']
    #allocation3 [shape = 's32[1]{0}', space=sflag, size = 0x4, scoped, tag = 'scoped memory for tpu_custom_call.1']
    #allocation4 [shape = 's32[1]{0}', space=sflag, size = 0x4, scoped, tag = 'scoped memory for tpu_custom_call.1']
    #allocation5 [shape = 'u8[8192]{0}', space=vmem, size = 0x2000, scoped, tag = 'input window, operand 1, single buffered']
    #allocation6 [shape = 's32[1]{0}', space=sflag, size = 0x4, scoped, tag = 'scoped memory for tpu_custom_call.1']
    #allocation7 [shape = 'u8[4096]{0}', space=vmem, size = 0x1000, scoped, tag = 'output window, operand 0, single buffered']
    %7 = vsyncpa [#allocation3], 0
    %8 = vsyncpa [#allocation6], 0
    %9 = vsyncpa [#allocation4], 0
    // Predicated region
    $region2: #{tpu_custom_call.1} parent=1 // pred_check
      _
    $region3: #{tpu_custom_call.1} parent=1 // pred_check_branch
      %11 = sbr.rel (0) target = $region5
    $region4: #{tpu_custom_call.1} parent=1 // pred_region
      %s12 = sadd.s32 0, 0
      %s13 = smul.u32 2, %s12
      %s15 = ssub.s32 256, 256
      %16 = vsyncadd [#allocation3], %s15
      %s17 = smul.addr %s13, 128
      %s18 = scalar_lea.hbm %s0, %s17
      %s19 = sshll.u32 [#allocation2], 4
      %s20 = int_to_ptr.vmem [resolvable:$true] %s19
      %25 = dma.hbm_to_vmem [thread:$0]  %s18, 256, %s20, [#allocation3], 128, 128, 8
    $region5: #{tpu_custom_call.1} parent=1 // pred_fallthru
      _
    // Predicated region
    $region6: #{tpu_custom_call.1} parent=1 // pred_check
      _
    $region7: #{tpu_custom_call.1} parent=1 // pred_check_branch
      %27 = sbr.rel (0) target = $region9
    $region8: #{tpu_custom_call.1} parent=1 // pred_region
      %s28 = sadd.s32 0, 0
      %s29 = smul.u32 2, %s28
      %s31 = ssub.s32 256, 256
      %32 = vsyncadd [#allocation6], %s31
      %s33 = smul.addr %s29, 128
      %s34 = scalar_lea.hbm %s1, %s33
      %s35 = sshll.u32 [#allocation5], 4
      %s36 = int_to_ptr.vmem [resolvable:$true] %s35
      %41 = dma.hbm_to_vmem [thread:$0]  %s34, 256, %s36, [#allocation6], 128, 128, 8
    $region9: #{tpu_custom_call.1} parent=1 // pred_fallthru
      _
    // Predicated region
    $region10: #{tpu_custom_call.1} parent=1 // pred_check
      _
    $region11: #{tpu_custom_call.1} parent=1 // pred_check_branch
      %43 = sbr.rel (0) target = $region13
    $region12: #{tpu_custom_call.1} parent=1 // pred_region
      %44 = dma.done [#allocation3], 256
    $region13: #{tpu_custom_call.1} parent=1 // pred_fallthru
      _
    // Predicated region
    $region14: #{tpu_custom_call.1} parent=1 // pred_check
      _
    $region15: #{tpu_custom_call.1} parent=1 // pred_check_branch
      %46 = sbr.rel (0) target = $region17
    $region16: #{tpu_custom_call.1} parent=1 // pred_region
      %47 = dma.done [#allocation6], 256
    $region17: #{tpu_custom_call.1} parent=1 // pred_fallthru
      _
    %s48 = sadd.s32 0, 0
    %s49 = smul.u32 2, %s48
    %s50 = sadd.s32 0, 0
    %s51 = smul.u32 2, %s50
    %p52 = scmp.eq.s32.totalorder 0, 0
    // Predicated region
    $region18: #{tpu_custom_call.1} parent=1 // pred_check
      %p53 = pneg %p52
    $region19: #{tpu_custom_call.1} parent=1 // pred_check_branch
      %55 = sbr.rel (%p53) target = $region21
    $region20: #{tpu_custom_call.1} parent=1 // pred_region
      %56 = vst [vmem:[#allocation7] sm:$0xff] 0.0
    $region21: #{tpu_custom_call.1} parent=1 // pred_fallthru
      _
    %v57 = vld [vmem:[#allocation2] sm:$0xff]
    %v58 = vld [vmem:[#allocation2 + $0x8] sm:$0xff]
    %v59 = vld [vmem:[#allocation5] sm:$0xff]
    %v60 = vld [vmem:[#allocation5 + $0x8] sm:$0xff]
    %v61 = vmax.f32 %v57, 0.0
    %v62 = vmax.f32 %v58, 0.0
    %v63 = vmul.f32 %v57, %v59
    %v64 = vmul.f32 %v58, %v60
    %v65 = vsub.f32 %v61, %v63
    %v66 = vsub.f32 %v62, %v64
    %v67 = vand.u32 2147483647, %v57
    %v68 = vand.u32 2147483647, %v58
    %v69 = vsub.f32 0.0, %v67
    %v70 = vsub.f32 0.0, %v68
    %v71 = vmul.f32 %v69, 1.442695
    %v72 = vpow.pop %v71
    %v73 = vmul.f32 %v70, 1.442695
    %v74 = vpow.pop %v73
    %v75 = vadd.f32 %v72, 1.0
    %v76 = vlog2.pop %v75
    %v77 = vmul.f32 %v76, 0.6931472
    %v78 = vmul.f32 -0.5, %v72
    %v79 = vadd.f32 %v78, 1.0
    %v80 = vmul.f32 %v79, %v72
    %v81 = vand.u32 2147483647, %v72
    %vm82 = vcmp.lt.f32.partialorder %v81, 0.0004427343
    %v83 = vsel %vm82, %v80, %v77
    %v84 = vadd.f32 %v74, 1.0
    %v85 = vlog2.pop %v84
    %v86 = vmul.f32 %v85, 0.6931472
    %v87 = vmul.f32 -0.5, %v74
    %v88 = vadd.f32 %v87, 1.0
    %v89 = vmul.f32 %v88, %v74
    %v90 = vand.u32 2147483647, %v74
    %vm91 = vcmp.lt.f32.partialorder %v90, 0.0004427343
    %v92 = vsel %vm91, %v89, %v86
    %v93 = vadd.f32 %v65, %v83
    %v94 = vadd.f32 %v66, %v92
    %v95 = vsub.f32 0.0, %v93
    %v96 = vsub.f32 0.0, %v94
    %v97 = vmul.f32 %v95, 1.442695
    %v98 = vpow.pop %v97
    %v99 = vmul.f32 %v96, 1.442695
    %v100 = vpow.pop %v99
    %v101 = vsub.f32 1.0, %v98
    %v102 = vsub.f32 1.0, %v100
    %v103 = vmul.f32 %v101, 0.25
    %v104 = vmul.f32 %v102, 0.25
    %v105 = vmul.f32 %v103, %v101
    %v106 = vmul.f32 %v104, %v102
    %v107 = vmul.f32 %v105, %v93
    %v108 = vmul.f32 %v106, %v94
    %v109 = vld [vmem:[#allocation7] sm:$0xff]
    %v110 = vadd.f32 %v107, %v108
    %v111 = vadd.f32 %v109, %v110
    %112 = vst [vmem:[#allocation7] sm:$0xff] %v111
    // Predicated region
    $region22: #{tpu_custom_call.1} parent=1 // pred_check
      _
    $region23: #{tpu_custom_call.1} parent=1 // pred_check_branch
      %114 = sbr.rel (0) target = $region25
    $region24: #{tpu_custom_call.1} parent=1 // pred_region
      %s116 = ssub.s32 128, 128
      %117 = vsyncadd [#allocation4], %s116
      %s119 = sshll.u32 [#allocation7], 4
      %s120 = int_to_ptr.vmem [resolvable:$true] %s119
      %122 = dma.vmem_to_hbm [thread:$0]  %s120, 128, %s2, [#allocation4]
    $region25: #{tpu_custom_call.1} parent=1 // pred_fallthru
      _
    // Predicated region
    $region26: #{tpu_custom_call.1} parent=1 // pred_check
      _
    $region27: #{tpu_custom_call.1} parent=1 // pred_check_branch
      %124 = sbr.rel (0) target = $region29
    $region28: #{tpu_custom_call.1} parent=1 // pred_region
      %125 = dma.done [#allocation4], 128
    $region29: #{tpu_custom_call.1} parent=1 // pred_fallthru
      _
    %126 = vsyncpa [#allocation3], 1
    %127 = vsyncpa [#allocation6], 1
    %128 = vsyncpa [#allocation4], 1

</llo_original>
